<compile_context>
chip_gen: v7x
topology: tpu7x:2x2x1
jax: 0.10.0
libtpu: 0.0.40
codegen_flags: <defaults>
</compile_context>

<pallas_src>
import jax
import jax.numpy as jnp
from jax.experimental import pallas as pl
from jax.experimental.pallas import tpu as pltpu


def _round_up(n, m):
    return ((n + m - 1) // m) * m


def mlp_kernel(x_ref, w1_ref, b1_ref, w2_ref, b2_ref, w3_ref, b3_ref, o_ref):
    # fc1 + relu  (MXU, f32 accumulation; x/w1 may be bf16, K=466 is
    # zero-masked by Mosaic).
    h1 = jnp.dot(x_ref[...], w1_ref[...], preferred_element_type=jnp.float32)
    h1 = jnp.maximum(h1 + b1_ref[...], 0.0)
    # fc2 + relu  (MXU)
    h2 = jnp.dot(h1, w2_ref[...], preferred_element_type=jnp.float32)
    h2 = jnp.maximum(h2 + b2_ref[...], 0.0)
    # fc3 has out_features == 1: keep it off the MXU.  VPU multiply + XLU lane
    # reduction (w3 is passed as a (1, 32) row) instead of an MXU pass that
    # would produce a single column.
    logits = jnp.sum(h2 * w3_ref[...], axis=-1, keepdims=True) + b3_ref[...]
    o_ref[...] = jax.nn.sigmoid(logits).astype(o_ref.dtype)


def simple_nn_forward(x, params, *, batch_tile=1024):
    """Fused SimpleNN forward via a Pallas TPU kernel.

    x: [B, F] float32 or bfloat16 (bf16 halves the dominant HBM stream;
       accumulation stays f32).
    params: dict with w1 [F,64], b1 [1,64], w2 [64,32], b2 [1,32],
            w3 [32,1], b3 [1,1]  (float32).
    batch_tile: rows per grid step (multiple of 8).  Default 1024 keeps the
      double-buffered x tile at ~2 MiB/buffer (f32, 512 lanes after internal
      lane padding), safe within scoped VMEM on v5e/v6e/v7x.
    """
    B, F = x.shape
    w1, b1 = params["w1"], params["b1"]
    w2, b2 = params["w2"], params["b2"]
    w3, b3 = params["w3"], params["b3"]
    H1 = w1.shape[1]
    H2 = w2.shape[1]
    assert w1.shape[0] == F

    # Effective tile: don't blow tiny batches up to the default tile, keep the
    # f32/bf16 sublane multiple-of-8 constraint.  Partial last block (B % bt)
    # is handled by the Pallas pipeline (masked writeback).
    bt = _round_up(min(batch_tile, _round_up(B, 8)), 8)
    grid = (pl.cdiv(B, bt),)

    # Match w1 to the activation dtype (w1 is ~120 KiB, negligible to cast);
    # fc3 weight as a (1, 32) row for the VPU/lane-reduce path.
    w1 = w1.astype(x.dtype)
    w3_row = w3.reshape(1, H2)

    weight_bytes = (w1.size * w1.dtype.itemsize
                    + b1.size * b1.dtype.itemsize
                    + w2.size * w2.dtype.itemsize
                    + b2.size * b2.dtype.itemsize
                    + w3.size * w3.dtype.itemsize
                    + b3.size * b3.dtype.itemsize)
    cost = pl.CostEstimate(
        flops=2 * B * (F * H1 + H1 * H2 + H2),
        transcendentals=B,  # one exp per row (sigmoid)
        bytes_accessed=B * F * x.dtype.itemsize + weight_bytes + B * 4,
    )

    out = pl.pallas_call(
        mlp_kernel,
        out_shape=jax.ShapeDtypeStruct((B, 1), jnp.float32),
        grid_spec=pltpu.PrefetchScalarGridSpec(
            num_scalar_prefetch=0,
            grid=grid,
            in_specs=[
                pl.BlockSpec((bt, F), lambda i: (i, 0)),     # x tile (streamed)
                pl.BlockSpec((F, H1), lambda i: (0, 0)),     # w1 (resident)
                pl.BlockSpec((1, H1), lambda i: (0, 0)),     # b1
                pl.BlockSpec((H1, H2), lambda i: (0, 0)),    # w2
                pl.BlockSpec((1, H2), lambda i: (0, 0)),     # b2
                pl.BlockSpec((1, H2), lambda i: (0, 0)),     # w3 as a row
                pl.BlockSpec((1, 1), lambda i: (0, 0)),      # b3
            ],
            out_specs=pl.BlockSpec((bt, 1), lambda i: (i, 0)),
        ),
        compiler_params=pltpu.CompilerParams(
            dimension_semantics=("parallel",),
        ),
        cost_estimate=cost,
    )(x, w1, b1, w2, b2, w3_row, b3)

    return out


def init_params(key, size=466):
    """Deterministic parameter init (uniform, PyTorch-Linear-like fan_in bound)."""
    ks = jax.random.split(key, 6)

    def linear(kw, kb, fan_in, fan_out):
        bound = 1.0 / jnp.sqrt(fan_in)
        w = jax.random.uniform(kw, (fan_in, fan_out), jnp.float32, -bound, bound)
        b = jax.random.uniform(kb, (1, fan_out), jnp.float32, -bound, bound)
        return w, b

    w1, b1 = linear(ks[0], ks[1], size, 64)
    w2, b2 = linear(ks[2], ks[3], 64, 32)
    w3, b3 = linear(ks[4], ks[5], 32, 1)
    return dict(w1=w1, b1=b1, w2=w2, b2=b2, w3=w3, b3=b3)


def reference_forward(x, p):
    h1 = jnp.maximum(x @ p["w1"] + p["b1"], 0.0)
    h2 = jnp.maximum(h1 @ p["w2"] + p["b2"], 0.0)
    return jax.nn.sigmoid(h2 @ p["w3"] + p["b3"])


if __name__ == "__main__":
    key = jax.random.PRNGKey(0)
    k_x, k_p = jax.random.split(key)

    SIZE = 466   # input feature size (as in SimpleNN(size=466))
    B = 50       # small batch; not a multiple of the tile -> partial last block

    x = jax.random.normal(k_x, (B, SIZE), dtype=jnp.float32)
    params = init_params(k_p, size=SIZE)

    ref = jax.block_until_ready(reference_forward(x, params))

    # f32 path; small batch_tile so the grid has several steps even at this
    # toy size (exercises the pipelined path and the partial final block).
    out = jax.block_until_ready(simple_nn_forward(x, params, batch_tile=16))
    assert out.shape == (B, 1)
    assert jnp.allclose(out, ref, atol=1e-4, rtol=1e-4)

    # bf16-activation path (caller already holds x in bf16 -> half the HBM
    # traffic on the dominant stream); looser tolerance.
    out_bf16 = jax.block_until_ready(
        simple_nn_forward(x.astype(jnp.bfloat16), params, batch_tile=16))
    assert out_bf16.shape == (B, 1)
    assert jnp.allclose(out_bf16, ref, atol=5e-2)

    print("KERNEL_OK")
</pallas_src>

<mosaic_0001>
module attributes {stable_mosaic.version = 11 : i64} {
  func.func @mlp_kernel(%arg0: i32, %arg1: memref<16x466xf32, #tpu.memory_space<vmem>>, %arg2: memref<466x64xf32, #tpu.memory_space<vmem>>, %arg3: memref<1x64xf32, #tpu.memory_space<vmem>>, %arg4: memref<64x32xf32, #tpu.memory_space<vmem>>, %arg5: memref<1x32xf32, #tpu.memory_space<vmem>>, %arg6: memref<1x32xf32, #tpu.memory_space<vmem>>, %arg7: memref<1x1xf32, #tpu.memory_space<vmem>>, %arg8: memref<16x1xf32, #tpu.memory_space<vmem>>) attributes {dimension_semantics = [#tpu.dimension_semantics<parallel>], iteration_bounds = array<i64: 4>, scalar_prefetch = 0 : i64, scratch_operands = 0 : i64, tpu.core_type = #tpu.core_type<tc>, window_params = [{transform_indices = @transform_0, window_bounds = array<i64: 16, 466>}, {pipeline_mode = #tpu.pipeline_mode<synchronous>, transform_indices = @transform_1, window_bounds = array<i64: 466, 64>}, {pipeline_mode = #tpu.pipeline_mode<synchronous>, transform_indices = @transform_2, window_bounds = array<i64: 1, 64>}, {pipeline_mode = #tpu.pipeline_mode<synchronous>, transform_indices = @transform_3, window_bounds = array<i64: 64, 32>}, {pipeline_mode = #tpu.pipeline_mode<synchronous>, transform_indices = @transform_4, window_bounds = array<i64: 1, 32>}, {pipeline_mode = #tpu.pipeline_mode<synchronous>, transform_indices = @transform_5, window_bounds = array<i64: 1, 32>}, {pipeline_mode = #tpu.pipeline_mode<synchronous>, transform_indices = @transform_6, window_bounds = array<i64: 1, 1>}, {transform_indices = @transform_7, window_bounds = array<i64: 16, 1>}]} {
    %c0 = arith.constant 0 : index
    %c0_0 = arith.constant 0 : index
    %0 = vector.load %arg1[%c0, %c0_0] : memref<16x466xf32, #tpu.memory_space<vmem>>, vector<16x466xf32>
    %c0_1 = arith.constant 0 : index
    %c0_2 = arith.constant 0 : index
    %1 = vector.load %arg2[%c0_1, %c0_2] : memref<466x64xf32, #tpu.memory_space<vmem>>, vector<466x64xf32>
    %cst = arith.constant dense<0.000000e+00> : vector<16x64xf32>
    %2 = tpu.matmul %0, %1, %cst {dimension_numbers = #tpu.dot_dimension_numbers<[1], [0], [0], [1], [0, 0, 1, 1], [], []>} : vector<16x466xf32>, vector<466x64xf32>, vector<16x64xf32> -> vector<16x64xf32>
    %c0_3 = arith.constant 0 : index
    %c0_4 = arith.constant 0 : index
    %3 = vector.load %arg3[%c0_3, %c0_4] : memref<1x64xf32, #tpu.memory_space<vmem>>, vector<1x64xf32>
    %4 = vector.broadcast %3 : vector<1x64xf32> to vector<16x64xf32>
    %5 = arith.addf %2, %4 : vector<16x64xf32>
    %cst_5 = arith.constant 0.000000e+00 : f32
    %6 = vector.broadcast %cst_5 : f32 to vector<16x64xf32>
    %7 = arith.maximumf %5, %6 : vector<16x64xf32>
    %c0_6 = arith.constant 0 : index
    %c0_7 = arith.constant 0 : index
    %8 = vector.load %arg4[%c0_6, %c0_7] : memref<64x32xf32, #tpu.memory_space<vmem>>, vector<64x32xf32>
    %cst_8 = arith.constant dense<0.000000e+00> : vector<16x32xf32>
    %9 = tpu.matmul %7, %8, %cst_8 {dimension_numbers = #tpu.dot_dimension_numbers<[1], [0], [0], [1], [0, 0, 1, 1], [], []>} : vector<16x64xf32>, vector<64x32xf32>, vector<16x32xf32> -> vector<16x32xf32>
    %c0_9 = arith.constant 0 : index
    %c0_10 = arith.constant 0 : index
    %10 = vector.load %arg5[%c0_9, %c0_10] : memref<1x32xf32, #tpu.memory_space<vmem>>, vector<1x32xf32>
    %11 = vector.broadcast %10 : vector<1x32xf32> to vector<16x32xf32>
    %12 = arith.addf %9, %11 : vector<16x32xf32>
    %cst_11 = arith.constant 0.000000e+00 : f32
    %13 = vector.broadcast %cst_11 : f32 to vector<16x32xf32>
    %14 = arith.maximumf %12, %13 : vector<16x32xf32>
    %c0_12 = arith.constant 0 : index
    %c0_13 = arith.constant 0 : index
    %15 = vector.load %arg6[%c0_12, %c0_13] : memref<1x32xf32, #tpu.memory_space<vmem>>, vector<1x32xf32>
    %16 = vector.broadcast %15 : vector<1x32xf32> to vector<16x32xf32>
    %17 = arith.mulf %14, %16 : vector<16x32xf32>
    %cst_14 = arith.constant dense<0.000000e+00> : vector<16xf32>
    %18 = vector.multi_reduction <add>, %17, %cst_14 [1] : vector<16x32xf32> to vector<16xf32>
    %19 = vector.shape_cast %18 : vector<16xf32> to vector<16x1xf32>
    %c0_15 = arith.constant 0 : index
    %c0_16 = arith.constant 0 : index
    %20 = vector.load %arg7[%c0_15, %c0_16] : memref<1x1xf32, #tpu.memory_space<vmem>>, vector<1x1xf32>
    %21 = vector.broadcast %20 : vector<1x1xf32> to vector<16x1xf32>
    %22 = arith.addf %19, %21 : vector<16x1xf32>
    %23 = arith.negf %22 : vector<16x1xf32>
    %24 = math.exp %23 : vector<16x1xf32>
    %cst_17 = arith.constant 1.000000e+00 : f32
    %25 = vector.broadcast %cst_17 : f32 to vector<16x1xf32>
    %26 = arith.addf %25, %24 : vector<16x1xf32>
    %27 = arith.divf %25, %26 : vector<16x1xf32>
    %c0_18 = arith.constant 0 : index
    %c0_19 = arith.constant 0 : index
    %28 = vector.load %arg8[%c0_18, %c0_19] : memref<16x1xf32, #tpu.memory_space<vmem>>, vector<16x1xf32>
    tpu.vector_store %arg8[%c0_18, %c0_19], %27 {strides = array<i32>} : memref<16x1xf32, #tpu.memory_space<vmem>>, vector<16x1xf32>,
    return
  }
  func.func @transform_0(%arg0: i32) -> (i32, i32) {
    %c0_i32 = arith.constant 0 : i32
    %c0_i32_0 = arith.constant 0 : i32
    return %arg0, %c0_i32 : i32, i32
  }
  func.func @transform_1(%arg0: i32) -> (i32, i32) {
    %c0_i32 = arith.constant 0 : i32
    %c0_i32_0 = arith.constant 0 : i32
    %c0_i32_1 = arith.constant 0 : i32
    return %c0_i32, %c0_i32_0 : i32, i32
  }
  func.func @transform_2(%arg0: i32) -> (i32, i32) {
    %c0_i32 = arith.constant 0 : i32
    %c0_i32_0 = arith.constant 0 : i32
    %c0_i32_1 = arith.constant 0 : i32
    return %c0_i32, %c0_i32_0 : i32, i32
  }
  func.func @transform_3(%arg0: i32) -> (i32, i32) {
    %c0_i32 = arith.constant 0 : i32
    %c0_i32_0 = arith.constant 0 : i32
    %c0_i32_1 = arith.constant 0 : i32
    return %c0_i32, %c0_i32_0 : i32, i32
  }
  func.func @transform_4(%arg0: i32) -> (i32, i32) {
    %c0_i32 = arith.constant 0 : i32
    %c0_i32_0 = arith.constant 0 : i32
    %c0_i32_1 = arith.constant 0 : i32
    return %c0_i32, %c0_i32_0 : i32, i32
  }
  func.func @transform_5(%arg0: i32) -> (i32, i32) {
    %c0_i32 = arith.constant 0 : i32
    %c0_i32_0 = arith.constant 0 : i32
    %c0_i32_1 = arith.constant 0 : i32
    return %c0_i32, %c0_i32_0 : i32, i32
  }
  func.func @transform_6(%arg0: i32) -> (i32, i32) {
    %c0_i32 = arith.constant 0 : i32
    %c0_i32_0 = arith.constant 0 : i32
    %c0_i32_1 = arith.constant 0 : i32
    return %c0_i32, %c0_i32_0 : i32, i32
  }
  func.func @transform_7(%arg0: i32) -> (i32, i32) {
    %c0_i32 = arith.constant 0 : i32
    %c0_i32_0 = arith.constant 0 : i32
    return %arg0, %c0_i32 : i32, i32
  }
}

</mosaic_0001>

<llo_original>
// kernel: tpu_custom_call.1
$region0: #{tpu_custom_call.1}
  #allocation0 [shape = 'u32[]', space=smem, size = 0x4, offset = 0x4, fixed_abs, tag = 'smem constant byte address 0x4 - core index']
  #allocation1 [shape = 'u32[144,128]{1,0:T(1,128)}', space=vmem, size = 0x12000, scoped, tag = 'internal scratch']
  #allocation2 [shape = 'f32[1,1]{1,0:T(1,128)S(1)}', space=vmem, size = 0x200, scoped, tag = 'scoped memory for tpu_custom_call.1']
  %s0 = inlined_call_operand.vmem [shape: f32[50,466], index: 0, kind: input, shape index: {}]
  %s1 = inlined_call_operand.vmem [shape: f32[466,64], index: 1, kind: input, shape index: {}]
  %s2 = inlined_call_operand.vmem [shape: f32[1,64], index: 2, kind: input, shape index: {}]
  %s3 = inlined_call_operand.vmem [shape: f32[64,32], index: 3, kind: input, shape index: {}]
  %s4 = inlined_call_operand.vmem [shape: f32[1,32], index: 4, kind: input, shape index: {}]
  %s5 = inlined_call_operand.vmem [shape: f32[1,32], index: 5, kind: input, shape index: {}]
  %s6 = inlined_call_operand.<no memory space> [shape: f32[1,1], index: 6, kind: input, shape index: {}]
  %s7 = inlined_call_operand.vmem [shape: f32[50,1], index: 7, kind: output, shape index: {}]
  %s8 = sld [smem:[#allocation0]]
  $region109: #{tpu_custom_call.1} parent=0
    _
  %s10 = ssub.s32 1, %s8
  %s11 = scalar_select 0, %s10, %s8
  %v12 = vstv %s6
  %13 = vst [vmem:[#allocation2] sm:$0x1] %v12
  $region1: #{tpu_custom_call.1} parent=0
    #allocation3 [shape = 'u8[16384]{0}', space=vmem, size = 0x4000, scoped, tag = 'output window, operand 0']
    loop: start=0, step=1, limit=6
    $region2: #{tpu_custom_call.1} parent=1 // loop_pre_header
      _
    $region3: #{tpu_custom_call.1} parent=1 // loop_header
      %s15 = sphi 0, %s19
      %p16 = scmp.ge.s32.totalorder %s15, 6
      %s25 = sphi 0, %s27
      %s28 = sphi 0, %s25
      %s29 = sphi 0, %s28
      %s45 = sphi 0, %s29
      %s49 = sphi 0, %s49
      %s51 = sphi 0, %s49
      %s52 = sphi 0, %s51
      %s66 = sphi 0, %s52
      %s70 = sphi 0, %s70
      %s72 = sphi 0, %s70
      %s73 = sphi 0, %s72
      %s87 = sphi 0, %s73
      %s91 = sphi 0, %s91
      %s93 = sphi 0, %s91
      %s94 = sphi 0, %s93
      %s108 = sphi 0, %s94
      %s112 = sphi 0, %s112
      %s114 = sphi 0, %s112
      %s115 = sphi 0, %s114
      %s129 = sphi 0, %s115
      %s133 = sphi 0, %s133
      %s135 = sphi 0, %s133
      %s136 = sphi 0, %s135
      %s150 = sphi 0, %s136
      %s154 = sphi 0, %s154
      %s156 = sphi 0, %s154
      %s157 = sphi 0, %s156
      %s171 = sphi 0, %s157
      %s177 = sphi 0, %s179
      %s180 = sphi 0, %s177
      %s181 = sphi 0, %s180
      %s197 = sphi 0, %s181
    $region4: #{tpu_custom_call.1} parent=1 // loop_header_branch
      %18 = sbr.rel (%p16) target = $region8
    $region5: #{tpu_custom_call.1} parent=1 // loop_body
      %s20 = ssub.s32 %s15, 1
      %s21 = ssub.s32 %s15, 2
      %s22 = sadd.s32 %s15, 1
      %s23 = ssub.s32 %s15, %s22
      %p24 = scmp.eq.s32.totalorder %s23, 0
      %s26 = sadd.s32 %s25, 1
      %s27 = scalar_select %p24, %s25, %s26
      %p30 = pneg %p24
      %p31 = scmp.eq.s32.totalorder %s15, 3
      %p32 = por %p30, %p31
      %p33 = scmp.ne.s32.totalorder %s25, %s28
      %p34 = scmp.eq.s32.totalorder %s15, 0
      %p35 = por %p33, %p34
      %p36 = scmp.ne.s32.totalorder %s25, %s28
      %p37 = scmp.eq.s32.totalorder %s20, 3
      %p38 = por %p36, %p37
      %p39 = scmp.ne.s32.totalorder %s28, %s29
      %p40 = scmp.eq.s32.totalorder %s20, 0
      %p41 = por %p39, %p40
      %p42 = scmp.ne.s32.totalorder %s28, %s29
      %p43 = scmp.eq.s32.totalorder %s21, 3
      %p44 = por %p42, %p43
      %p46 = scmp.ne.s32.totalorder %s29, %s45
      %p47 = scmp.eq.s32.totalorder %s21, 0
      %p48 = por %p46, %p47
      %s50 = sadd.s32 %s49, 1
      %p53 = scmp.eq.s32.totalorder %s15, 3
      %p54 = scmp.ne.s32.totalorder %s49, %s51
      %p55 = scmp.eq.s32.totalorder %s15, 0
      %p56 = por %p54, %p55
      %p57 = scmp.ne.s32.totalorder %s49, %s51
      %p58 = scmp.eq.s32.totalorder %s20, 3
      %p59 = por %p57, %p58
      %p60 = scmp.ne.s32.totalorder %s51, %s52
      %p61 = scmp.eq.s32.totalorder %s20, 0
      %p62 = por %p60, %p61
      %p63 = scmp.ne.s32.totalorder %s51, %s52
      %p64 = scmp.eq.s32.totalorder %s21, 3
      %p65 = por %p63, %p64
      %p67 = scmp.ne.s32.totalorder %s52, %s66
      %p68 = scmp.eq.s32.totalorder %s21, 0
      %p69 = por %p67, %p68
      %s71 = sadd.s32 %s70, 1
      %p74 = scmp.eq.s32.totalorder %s15, 3
      %p75 = scmp.ne.s32.totalorder %s70, %s72
      %p76 = scmp.eq.s32.totalorder %s15, 0
      %p77 = por %p75, %p76
      %p78 = scmp.ne.s32.totalorder %s70, %s72
      %p79 = scmp.eq.s32.totalorder %s20, 3
      %p80 = por %p78, %p79
      %p81 = scmp.ne.s32.totalorder %s72, %s73
      %p82 = scmp.eq.s32.totalorder %s20, 0
      %p83 = por %p81, %p82
      %p84 = scmp.ne.s32.totalorder %s72, %s73
      %p85 = scmp.eq.s32.totalorder %s21, 3
      %p86 = por %p84, %p85
      %p88 = scmp.ne.s32.totalorder %s73, %s87
      %p89 = scmp.eq.s32.totalorder %s21, 0
      %p90 = por %p88, %p89
      %s92 = sadd.s32 %s91, 1
      %p95 = scmp.eq.s32.totalorder %s15, 3
      %p96 = scmp.ne.s32.totalorder %s91, %s93
      %p97 = scmp.eq.s32.totalorder %s15, 0
      %p98 = por %p96, %p97
      %p99 = scmp.ne.s32.totalorder %s91, %s93
      %p100 = scmp.eq.s32.totalorder %s20, 3
      %p101 = por %p99, %p100
      %p102 = scmp.ne.s32.totalorder %s93, %s94
      %p103 = scmp.eq.s32.totalorder %s20, 0
      %p104 = por %p102, %p103
      %p105 = scmp.ne.s32.totalorder %s93, %s94
      %p106 = scmp.eq.s32.totalorder %s21, 3
      %p107 = por %p105, %p106
      %p109 = scmp.ne.s32.totalorder %s94, %s108
      %p110 = scmp.eq.s32.totalorder %s21, 0
      %p111 = por %p109, %p110
      %s113 = sadd.s32 %s112, 1
      %p116 = scmp.eq.s32.totalorder %s15, 3
      %p117 = scmp.ne.s32.totalorder %s112, %s114
      %p118 = scmp.eq.s32.totalorder %s15, 0
      %p119 = por %p117, %p118
      %p120 = scmp.ne.s32.totalorder %s112, %s114
      %p121 = scmp.eq.s32.totalorder %s20, 3
      %p122 = por %p120, %p121
      %p123 = scmp.ne.s32.totalorder %s114, %s115
      %p124 = scmp.eq.s32.totalorder %s20, 0
      %p125 = por %p123, %p124
      %p126 = scmp.ne.s32.totalorder %s114, %s115
      %p127 = scmp.eq.s32.totalorder %s21, 3
      %p128 = por %p126, %p127
      %p130 = scmp.ne.s32.totalorder %s115, %s129
      %p131 = scmp.eq.s32.totalorder %s21, 0
      %p132 = por %p130, %p131
      %s134 = sadd.s32 %s133, 1
      %p137 = scmp.eq.s32.totalorder %s15, 3
      %p138 = scmp.ne.s32.totalorder %s133, %s135
      %p139 = scmp.eq.s32.totalorder %s15, 0
      %p140 = por %p138, %p139
      %p141 = scmp.ne.s32.totalorder %s133, %s135
      %p142 = scmp.eq.s32.totalorder %s20, 3
      %p143 = por %p141, %p142
      %p144 = scmp.ne.s32.totalorder %s135, %s136
      %p145 = scmp.eq.s32.totalorder %s20, 0
      %p146 = por %p144, %p145
      %p147 = scmp.ne.s32.totalorder %s135, %s136
      %p148 = scmp.eq.s32.totalorder %s21, 3
      %p149 = por %p147, %p148
      %p151 = scmp.ne.s32.totalorder %s136, %s150
      %p152 = scmp.eq.s32.totalorder %s21, 0
      %p153 = por %p151, %p152
      %s155 = sadd.s32 %s154, 1
      %p158 = scmp.eq.s32.totalorder %s15, 3
      %p159 = scmp.ne.s32.totalorder %s154, %s156
      %p160 = scmp.eq.s32.totalorder %s15, 0
      %p161 = por %p159, %p160
      %p162 = scmp.ne.s32.totalorder %s154, %s156
      %p163 = scmp.eq.s32.totalorder %s20, 3
      %p164 = por %p162, %p163
      %p165 = scmp.ne.s32.totalorder %s156, %s157
      %p166 = scmp.eq.s32.totalorder %s20, 0
      %p167 = por %p165, %p166
      %p168 = scmp.ne.s32.totalorder %s156, %s157
      %p169 = scmp.eq.s32.totalorder %s21, 3
      %p170 = por %p168, %p169
      %p172 = scmp.ne.s32.totalorder %s157, %s171
      %p173 = scmp.eq.s32.totalorder %s21, 0
      %p174 = por %p172, %p173
      %s175 = ssub.s32 %s15, %s22
      %p176 = scmp.eq.s32.totalorder %s175, 0
      %s178 = sadd.s32 %s177, 1
      %s179 = scalar_select %p176, %s177, %s178
      %p182 = pneg %p176
      %p183 = scmp.eq.s32.totalorder %s15, 3
      %p184 = por %p182, %p183
      %p185 = scmp.ne.s32.totalorder %s177, %s180
      %p186 = scmp.eq.s32.totalorder %s15, 0
      %p187 = por %p185, %p186
      %p188 = scmp.ne.s32.totalorder %s177, %s180
      %p189 = scmp.eq.s32.totalorder %s20, 3
      %p190 = por %p188, %p189
      %p191 = scmp.ne.s32.totalorder %s180, %s181
      %p192 = scmp.eq.s32.totalorder %s20, 0
      %p193 = por %p191, %p192
      %p194 = scmp.ne.s32.totalorder %s180, %s181
      %p195 = scmp.eq.s32.totalorder %s21, 3
      %p196 = por %p194, %p195
      %p198 = scmp.ne.s32.totalorder %s181, %s197
      %p199 = scmp.eq.s32.totalorder %s21, 0
      %p200 = por %p198, %p199
      %p201 = scmp.le.s32.totalorder 1, %s15
      %p202 = scmp.lt.s32.totalorder %s15, 5
      %p203 = pnand %p201, %p202
      %p204 = pneg %p203
      // Predicated region
      $region9: #{tpu_custom_call.1} parent=5 // pred_check
        _
      $region10: #{tpu_custom_call.1} parent=5 // pred_check_branch
        %206 = sbr.rel (%p203) target = $region12
      $region11: #{tpu_custom_call.1} parent=5 // pred_region
        %s207 = ssub.s32 %s15, 1
        // Predicated region
        $region13: #{tpu_custom_call.1} parent=11 // pred_check
          %p208 = pneg %p62
        $region14: #{tpu_custom_call.1} parent=11 // pred_check_branch
          %210 = sbr.rel (%p208) target = $region16
        $region15: #{tpu_custom_call.1} parent=11 // pred_region
          _
        $region16: #{tpu_custom_call.1} parent=11 // pred_fallthru
          _
        // Predicated region
        $region17: #{tpu_custom_call.1} parent=11 // pred_check
          %p211 = pneg %p83
        $region18: #{tpu_custom_call.1} parent=11 // pred_check_branch
          %213 = sbr.rel (%p211) target = $region20
        $region19: #{tpu_custom_call.1} parent=11 // pred_region
          _
        $region20: #{tpu_custom_call.1} parent=11 // pred_fallthru
          _
        // Predicated region
        $region21: #{tpu_custom_call.1} parent=11 // pred_check
          %p214 = pneg %p104
        $region22: #{tpu_custom_call.1} parent=11 // pred_check_branch
          %216 = sbr.rel (%p214) target = $region24
        $region23: #{tpu_custom_call.1} parent=11 // pred_region
          _
        $region24: #{tpu_custom_call.1} parent=11 // pred_fallthru
          _
        // Predicated region
        $region25: #{tpu_custom_call.1} parent=11 // pred_check
          %p217 = pneg %p125
        $region26: #{tpu_custom_call.1} parent=11 // pred_check_branch
          %219 = sbr.rel (%p217) target = $region28
        $region27: #{tpu_custom_call.1} parent=11 // pred_region
          _
        $region28: #{tpu_custom_call.1} parent=11 // pred_fallthru
          _
        // Predicated region
        $region29: #{tpu_custom_call.1} parent=11 // pred_check
          %p220 = pneg %p146
        $region30: #{tpu_custom_call.1} parent=11 // pred_check_branch
          %222 = sbr.rel (%p220) target = $region32
        $region31: #{tpu_custom_call.1} parent=11 // pred_region
          _
        $region32: #{tpu_custom_call.1} parent=11 // pred_fallthru
          _
        // Predicated region
        $region33: #{tpu_custom_call.1} parent=11 // pred_check
          %p223 = pneg %p167
        $region34: #{tpu_custom_call.1} parent=11 // pred_check_branch
          %225 = sbr.rel (%p223) target = $region36
        $region35: #{tpu_custom_call.1} parent=11 // pred_region
          _
        $region36: #{tpu_custom_call.1} parent=11 // pred_fallthru
          _
      $region12: #{tpu_custom_call.1} parent=5 // pred_fallthru
        _
      %p226 = scmp.lt.s32.totalorder %s15, 4
      // Predicated region
      $region37: #{tpu_custom_call.1} parent=5 // pred_check
        %p227 = pneg %p226
      $region38: #{tpu_custom_call.1} parent=5 // pred_check_branch
        %229 = sbr.rel (%p227) target = $region40
      $region39: #{tpu_custom_call.1} parent=5 // pred_region
        // Predicated region
        $region41: #{tpu_custom_call.1} parent=39 // pred_check
          %p230 = pneg %p35
        $region42: #{tpu_custom_call.1} parent=39 // pred_check_branch
          %232 = sbr.rel (%p230) target = $region44
        $region43: #{tpu_custom_call.1} parent=39 // pred_region
          %s233 = smul.u32 2, %s15
          %s234 = ssub.s32 7, %s233
          %p235 = scmp.lt.s32.totalorder %s234, 2
          %s236 = scalar_select %p235, %s234, 2
          %s237 = smul.u32 128, %s236
          %s238 = smul.u32 %s237, 4
          %p239 = scmp.lt.s32.totalorder %s233, 6
          %s240 = scalar_select %p239, %s233, 6
          %s241 = smul.addr %s240, 4
          %s242 = smul.addr %s241, 8
          %s243 = scalar_lea.vmem %s0, %s242
          %s244 = smul.u32 2, %s15
          %s245 = ssub.s32 7, %s244
          %p246 = scmp.lt.s32.totalorder %s245, 2
          %s247 = scalar_select %p246, %s245, 2
          %s248 = smul.u32 128, %s247
          %s249 = smul.u32 %s248, 4
        $region44: #{tpu_custom_call.1} parent=39 // pred_fallthru
          _
      $region40: #{tpu_custom_call.1} parent=5 // pred_fallthru
        _
      %p250 = scmp.le.s32.totalorder 1, %s15
      %p251 = scmp.lt.s32.totalorder %s15, 5
      %p252 = pnand %p250, %p251
      %p253 = pneg %p252
      // Predicated region
      $region45: #{tpu_custom_call.1} parent=5 // pred_check
        _
      $region46: #{tpu_custom_call.1} parent=5 // pred_check_branch
        %255 = sbr.rel (%p252) target = $region48
      $region47: #{tpu_custom_call.1} parent=5 // pred_region
        %s256 = ssub.s32 %s15, 1
        %s257 = smul.u32 2, %s20
        %s258 = ssub.s32 7, %s257
        %p259 = scmp.lt.s32.totalorder %s258, 2
        %s260 = scalar_select %p259, %s258, 2
        %s261 = smul.u32 128, %s260
        %s262 = smul.u32 %s261, 4
        %p263 = scmp.lt.s32.totalorder %s257, 6
        %s264 = scalar_select %p263, %s257, 6
        %s265 = smul.addr %s264, 4
        %s266 = smul.addr %s265, 8
        %s267 = scalar_lea.vmem %s0, %s266
        %p268 = pneg %p41
        %p269 = pneg %p38
        %p270 = pneg %p62
        %p271 = pneg %p59
        %p272 = pneg %p83
        %p273 = pneg %p80
        %p274 = pneg %p104
        %p275 = pneg %p101
        %p276 = pneg %p125
        %p277 = pneg %p122
        %p278 = pneg %p146
        %p279 = pneg %p143
        %p280 = pneg %p167
        %p281 = pneg %p164
        %p282 = pneg %p193
        %p283 = pneg %p190
        %s284 = sand.u32 %s180, 1
        %s285 = sand.u32 %s180, 1
        %s286 = smul.addr %s285, 16
        %s287 = scalar_lea.vmem [#allocation3], %s286
        %s288 = smul.u32 2, %s20
        %s289 = ssub.s32 7, %s288
        %p290 = scmp.lt.s32.totalorder %s289, 2
        %s291 = scalar_select %p290, %s289, 2
        %s292 = smul.u32 128, %s291
        %s293 = smul.u32 %s292, 4
        %p294 = scmp.lt.s32.totalorder %s288, 6
        %s295 = scalar_select %p294, %s288, 6
        %s296 = smul.addr %s295, 4
        %s297 = smul.addr %s296, 8
        %s298 = scalar_lea.vmem %s0, %s297
        %s299 = smul.u32 2, %s20
        %s300 = ssub.s32 7, %s299
        %p301 = scmp.lt.s32.totalorder %s300, 2
        %s302 = scalar_select %p301, %s300, 2
        %s303 = smul.u32 128, %s302
        %s304 = smul.u32 %s303, 4
        %s305 = smul.u32 2, %s20
        %s306 = ssub.s32 7, %s305
        %p307 = scmp.lt.s32.totalorder %s306, 2
        %s308 = scalar_select %p307, %s306, 2
        %s309 = smul.u32 128, %s308
        %v310 = vld [vmem:[%s298] sm:$0xff]
        %v311 = vld [vmem:[%s298 + $0x8] sm:$0xff]
        %v312 = vld [vmem:[%s298 + $0x10] sm:$0xff]
        %v313 = vld [vmem:[%s298 + $0x18] sm:$0xff]
        %v314 = vld [vmem:[%s298 + $0x20] sm:$0xff]
        %v315 = vld [vmem:[%s298 + $0x28] sm:$0xff]
        %v316 = vld [vmem:[%s298 + $0x30] sm:$0xff]
        %v317 = vld [vmem:[%s298 + $0x38] sm:$0xff]
        %v318 = vld [vmem:[%s1] sm:$0xff]
        %v319 = vld [vmem:[%s1 + $0x8] sm:$0xff]
        %v320 = vld [vmem:[%s1 + $0x10] sm:$0xff]
        %v321 = vld [vmem:[%s1 + $0x18] sm:$0xff]
        %v322 = vld [vmem:[%s1 + $0x20] sm:$0xff]
        %v323 = vld [vmem:[%s1 + $0x28] sm:$0xff]
        %v324 = vld [vmem:[%s1 + $0x30] sm:$0xff]
        %v325 = vld [vmem:[%s1 + $0x38] sm:$0xff]
        %v326 = vld [vmem:[%s1 + $0x40] sm:$0xff]
        %v327 = vld [vmem:[%s1 + $0x48] sm:$0xff]
        %v328 = vld [vmem:[%s1 + $0x50] sm:$0xff]
        %v329 = vld [vmem:[%s1 + $0x58] sm:$0xff]
        %v330 = vld [vmem:[%s1 + $0x60] sm:$0xff]
        %v331 = vld [vmem:[%s1 + $0x68] sm:$0xff]
        %v332 = vld [vmem:[%s1 + $0x70] sm:$0xff]
        %v333 = vld [vmem:[%s1 + $0x78] sm:$0xff]
        %v334 = vld [vmem:[%s1 + $0x80] sm:$0xff]
        %v335 = vld [vmem:[%s1 + $0x88] sm:$0xff]
        %v336 = vld [vmem:[%s1 + $0x90] sm:$0xff]
        %v337 = vld [vmem:[%s1 + $0x98] sm:$0xff]
        %v338 = vld [vmem:[%s1 + $0xa0] sm:$0xff]
        %v339 = vld [vmem:[%s1 + $0xa8] sm:$0xff]
        %v340 = vld [vmem:[%s1 + $0xb0] sm:$0xff]
        %v341 = vld [vmem:[%s1 + $0xb8] sm:$0xff]
        %v342 = vld [vmem:[%s1 + $0xc0] sm:$0xff]
        %v343 = vld [vmem:[%s1 + $0xc8] sm:$0xff]
        %v344 = vld [vmem:[%s1 + $0xd0] sm:$0xff]
        %v345 = vld [vmem:[%s1 + $0xd8] sm:$0xff]
        %v346 = vld [vmem:[%s1 + $0xe0] sm:$0xff]
        %v347 = vld [vmem:[%s1 + $0xe8] sm:$0xff]
        %v348 = vld [vmem:[%s1 + $0xf0] sm:$0xff]
        %v349 = vld [vmem:[%s1 + $0xf8] sm:$0xff]
        %v350 = vld [vmem:[%s1 + $0x100] sm:$0xff]
        %v351 = vld [vmem:[%s1 + $0x108] sm:$0xff]
        %v352 = vld [vmem:[%s1 + $0x110] sm:$0xff]
        %v353 = vld [vmem:[%s1 + $0x118] sm:$0xff]
        %v354 = vld [vmem:[%s1 + $0x120] sm:$0xff]
        %v355 = vld [vmem:[%s1 + $0x128] sm:$0xff]
        %v356 = vld [vmem:[%s1 + $0x130] sm:$0xff]
        %v357 = vld [vmem:[%s1 + $0x138] sm:$0xff]
        %v358 = vld [vmem:[%s1 + $0x140] sm:$0xff]
        %v359 = vld [vmem:[%s1 + $0x148] sm:$0xff]
        %v360 = vld [vmem:[%s1 + $0x150] sm:$0xff]
        %v361 = vld [vmem:[%s1 + $0x158] sm:$0xff]
        %v362 = vld [vmem:[%s1 + $0x160] sm:$0xff]
        %v363 = vld [vmem:[%s1 + $0x168] sm:$0xff]
        %v364 = vld [vmem:[%s1 + $0x170] sm:$0xff]
        %v365 = vld [vmem:[%s1 + $0x178] sm:$0xff]
        %v366 = vld [vmem:[%s1 + $0x180] sm:$0xff]
        %v367 = vld [vmem:[%s1 + $0x188] sm:$0xff]
        %v368 = vld [vmem:[%s1 + $0x190] sm:$0xff]
        %v369 = vld [vmem:[%s1 + $0x198] sm:$0xff]
        %v370 = vld [vmem:[%s1 + $0x1a0] sm:$0xff]
        %v371 = vld [vmem:[%s1 + $0x1a8] sm:$0xff]
        %v372 = vld [vmem:[%s1 + $0x1b0] sm:$0xff]
        %v373 = vld [vmem:[%s1 + $0x1b8] sm:$0xff]
        %v374 = vld [vmem:[%s1 + $0x1c0] sm:$0xff]
        %v375 = vld [vmem:[%s1 + $0x1c8] sm:$0xff]
        %v376 = vld [vmem:[%s1 + $0x1d0] sm:$0x3]
        %v377 = vld [vmem:[%s2] sm:$0x1]
        %v379 = vlaneseq
        %v380 = vshrl.u32 %v379, 7
        %v381 = vsub.s32 0, %v380
        %v382 = vrot.slane %v377, %v381
        %vm384 = vcmask 670720
        %v386 = vsel %vm384, %v313, 0
        %v389 = vsel %vm384, %v317, 0
        %vm391 = vcmask 1041408
        %v393 = vsel %vm391, %v376, 0
        %395 = vmatprep.subr.mxu0 0.0
        %396 = vmatpush1.msra.mxu0 %v318
        %397 = vmatprep.subr.mxu0 0.0
        %398 = vmatpush1.msra.mxu0 %v319
        %399 = vmatprep.subr.mxu0 0.0
        %400 = vmatpush1.msra.mxu0 %v320
        %401 = vmatprep.subr.mxu0 0.0
        %402 = vmatpush1.msra.mxu0 %v321
        %403 = vmatprep.subr.mxu0 0.0
        %404 = vmatpush1.msra.mxu0 %v322
        %405 = vmatprep.subr.mxu0 0.0
        %406 = vmatpush1.msra.mxu0 %v323
        %407 = vmatprep.subr.mxu0 0.0
        %408 = vmatpush1.msra.mxu0 %v324
        %409 = vmatprep.subr.mxu0 0.0
        %410 = vmatpush1.msra.mxu0 %v325
        %411 = vmatprep.subr.mxu0 0.0
        %412 = vmatpush1.msra.mxu0 %v326
        %413 = vmatprep.subr.mxu0 0.0
        %414 = vmatpush1.msra.mxu0 %v327
        %415 = vmatprep.subr.mxu0 0.0
        %416 = vmatpush1.msra.mxu0 %v328
        %417 = vmatprep.subr.mxu0 0.0
        %418 = vmatpush1.msra.mxu0 %v329
        %419 = vmatprep.subr.mxu0 0.0
        %420 = vmatpush1.msra.mxu0 %v330
        %421 = vmatprep.subr.mxu0 0.0
        %422 = vmatpush1.msra.mxu0 %v331
        %423 = vmatprep.subr.mxu0 0.0
        %424 = vmatpush1.msra.mxu0 %v332
        %425 = vmatprep.subr.mxu0 0.0
        %426 = vmatpush1.msra.mxu0 %v333
        %427 = vmatprep.subr.mxu0 0.0
        %428 = vmatpush1.msra.mxu0 %v334
        %429 = vmatprep.subr.mxu0 0.0
        %430 = vmatpush1.msra.mxu0 %v335
        %431 = vmatprep.subr.mxu0 0.0
        %432 = vmatpush1.msra.mxu0 %v336
        %433 = vmatprep.subr.mxu0 0.0
        %434 = vmatpush1.msra.mxu0 %v337
        %435 = vmatprep.subr.mxu0 0.0
        %436 = vmatpush1.msra.mxu0 %v338
        %437 = vmatprep.subr.mxu0 0.0
        %438 = vmatpush1.msra.mxu0 %v339
        %439 = vmatprep.subr.mxu0 0.0
        %440 = vmatpush1.msra.mxu0 %v340
        %441 = vmatprep.subr.mxu0 0.0
        %442 = vmatpush1.msra.mxu0 %v341
        %443 = vmatprep.subr.mxu0 0.0
        %444 = vmatpush1.msra.mxu0 %v342
        %445 = vmatprep.subr.mxu0 0.0
        %446 = vmatpush1.msra.mxu0 %v343
        %447 = vmatprep.subr.mxu0 0.0
        %448 = vmatpush1.msra.mxu0 %v344
        %449 = vmatprep.subr.mxu0 0.0
        %450 = vmatpush1.msra.mxu0 %v345
        %451 = vmatprep.subr.mxu0 0.0
        %452 = vmatpush1.msra.mxu0 %v346
        %453 = vmatprep.subr.mxu0 0.0
        %454 = vmatpush1.msra.mxu0 %v347
        %455 = vmatprep.subr.mxu0 0.0
        %456 = vmatpush1.msra.mxu0 %v348
        %457 = vmatprep.subr.mxu0 0.0
        %458 = vmatpush1.msra.mxu0 %v349
        %459 = vmatprep.mubr.f32.mxu0 %v311
        %460 = vmatmul.mubr.f32.gmra.mrb[0].mxu0 %v310
        %v461 = vpop.f32.mrb[0].mxu0
        %v462 = vadd.f32 %v382, %v461
        %v463 = vpop.f32.mrb[0].mxu0
        %464 = vmatprep.mubr.f32.mxu0 %v315
        %465 = vmatmul.mubr.f32.gmra.mrb[0].mxu0 %v314
        %v466 = vpop.f32.mrb[0].mxu0
        %v467 = vadd.f32 %v382, %v466
        %v468 = vpop.f32.mrb[0].mxu0
        %469 = vdwg.mxu0
        %470 = vmatprep.subr.mxu0 0.0
        %471 = vmatpush1.msra.mxu0 %v350
        %472 = vmatprep.subr.mxu0 0.0
        %473 = vmatpush1.msra.mxu0 %v351
        %474 = vmatprep.subr.mxu0 0.0
        %475 = vmatpush1.msra.mxu0 %v352
        %476 = vmatprep.subr.mxu0 0.0
        %477 = vmatpush1.msra.mxu0 %v353
        %478 = vmatprep.subr.mxu0 0.0
        %479 = vmatpush1.msra.mxu0 %v354
        %480 = vmatprep.subr.mxu0 0.0
        %481 = vmatpush1.msra.mxu0 %v355
        %482 = vmatprep.subr.mxu0 0.0
        %483 = vmatpush1.msra.mxu0 %v356
        %484 = vmatprep.subr.mxu0 0.0
        %485 = vmatpush1.msra.mxu0 %v357
        %486 = vmatprep.subr.mxu0 0.0
        %487 = vmatpush1.msra.mxu0 %v358
        %488 = vmatprep.subr.mxu0 0.0
        %489 = vmatpush1.msra.mxu0 %v359
        %490 = vmatprep.subr.mxu0 0.0
        %491 = vmatpush1.msra.mxu0 %v360
        %492 = vmatprep.subr.mxu0 0.0
        %493 = vmatpush1.msra.mxu0 %v361
        %494 = vmatprep.subr.mxu0 0.0
        %495 = vmatpush1.msra.mxu0 %v362
        %496 = vmatprep.subr.mxu0 0.0
        %497 = vmatpush1.msra.mxu0 %v363
        %498 = vmatprep.subr.mxu0 0.0
        %499 = vmatpush1.msra.mxu0 %v364
        %500 = vmatprep.subr.mxu0 0.0
        %501 = vmatpush1.msra.mxu0 %v365
        %502 = vmatprep.subr.mxu0 0.0
        %503 = vmatpush1.msra.mxu0 %v366
        %504 = vmatprep.subr.mxu0 0.0
        %505 = vmatpush1.msra.mxu0 %v367
        %506 = vmatprep.subr.mxu0 0.0
        %507 = vmatpush1.msra.mxu0 %v368
        %508 = vmatprep.subr.mxu0 0.0
        %509 = vmatpush1.msra.mxu0 %v369
        %510 = vmatprep.subr.mxu0 0.0
        %511 = vmatpush1.msra.mxu0 %v370
        %512 = vmatprep.subr.mxu0 0.0
        %513 = vmatpush1.msra.mxu0 %v371
        %514 = vmatprep.subr.mxu0 0.0
        %515 = vmatpush1.msra.mxu0 %v372
        %516 = vmatprep.subr.mxu0 0.0
        %517 = vmatpush1.msra.mxu0 %v373
        %518 = vmatprep.subr.mxu0 0.0
        %519 = vmatpush1.msra.mxu0 %v374
        %520 = vmatprep.subr.mxu0 0.0
        %521 = vmatpush1.msra.mxu0 %v375
        %522 = vmatprep.subr.mxu0 0.0
        %523 = vmatpush1.msra.mxu0 %v393
        %524 = vmatprep.subr.mxu0 0.0
        %525 = vmatpush1.msra.mxu0 0.0
        %526 = vmatprep.subr.mxu0 0.0
        %527 = vmatpush1.msra.mxu0 0.0
        %528 = vmatprep.subr.mxu0 0.0
        %529 = vmatpush1.msra.mxu0 0.0
        %530 = vmatprep.subr.mxu0 0.0
        %531 = vmatpush1.msra.mxu0 0.0
        %532 = vmatprep.subr.mxu0 0.0
        %533 = vmatpush1.msra.mxu0 0.0
        %534 = vmatprep.mubr.f32.mxu0 %v386
        %535 = vmatmul.mubr.f32.gmra.mrb[0].mxu0 %v312
        %v536 = vpop.f32.mrb[0].mxu0
        %v537 = vadd.f32 %v462, %v536
        %v538 = vpop.f32.mrb[0].mxu0
        %539 = vmatprep.mubr.f32.mxu0 %v389
        %540 = vmatmul.mubr.f32.gmra.mrb[0].mxu0 %v316
        %v541 = vpop.f32.mrb[0].mxu0
        %v542 = vadd.f32 %v467, %v541
        %v543 = vpop.f32.mrb[0].mxu0
        %544 = vdwg.mxu0
        %v545 = vmax.f32 %v537, 0.0
        %v546 = vmax.f32 %v542, 0.0
        %v547 = vld [vmem:[%s3] sm:$0xff]
        %v548 = vld [vmem:[%s3 + $0x8] sm:$0xff]
        %v549 = vld [vmem:[%s3 + $0x10] sm:$0xff]
        %v550 = vld [vmem:[%s3 + $0x18] sm:$0xff]
        %v551 = vld [vmem:[%s3 + $0x20] sm:$0xff]
        %v552 = vld [vmem:[%s3 + $0x28] sm:$0xff]
        %v553 = vld [vmem:[%s3 + $0x30] sm:$0xff]
        %v554 = vld [vmem:[%s3 + $0x38] sm:$0xff]
        %v555 = vld [vmem:[%s4] sm:$0x1]
        %v557 = vlaneseq
        %v558 = vshrl.u32 %v557, 7
        %v559 = vsub.s32 0, %v558
        %v560 = vrot.slane %v555, %v559
        %vm562 = vcmask 523264
        %v564 = vsel %vm562, %v545, 0
        %v567 = vsel %vm562, %v546, 0
        %569 = vmatprep.subr.mxu0 0.0
        %570 = vmatpush1.msra.mxu0 %v547
        %571 = vmatprep.subr.mxu0 0.0
        %572 = vmatpush1.msra.mxu0 %v548
        %573 = vmatprep.subr.mxu0 0.0
        %574 = vmatpush1.msra.mxu0 %v549
        %575 = vmatprep.subr.mxu0 0.0
        %576 = vmatpush1.msra.mxu0 %v550
        %577 = vmatprep.subr.mxu0 0.0
        %578 = vmatpush1.msra.mxu0 %v551
        %579 = vmatprep.subr.mxu0 0.0
        %580 = vmatpush1.msra.mxu0 %v552
        %581 = vmatprep.subr.mxu0 0.0
        %582 = vmatpush1.msra.mxu0 %v553
        %583 = vmatprep.subr.mxu0 0.0
        %584 = vmatpush1.msra.mxu0 %v554
        %585 = vmatprep.subr.mxu0 0.0
        %586 = vmatpush1.msra.mxu0 0.0
        %587 = vmatprep.subr.mxu0 0.0
        %588 = vmatpush1.msra.mxu0 0.0
        %589 = vmatprep.subr.mxu0 0.0
        %590 = vmatpush1.msra.mxu0 0.0
        %591 = vmatprep.subr.mxu0 0.0
        %592 = vmatpush1.msra.mxu0 0.0
        %593 = vmatprep.subr.mxu0 0.0
        %594 = vmatpush1.msra.mxu0 0.0
        %595 = vmatprep.subr.mxu0 0.0
        %596 = vmatpush1.msra.mxu0 0.0
        %597 = vmatprep.subr.mxu0 0.0
        %598 = vmatpush1.msra.mxu0 0.0
        %599 = vmatprep.subr.mxu0 0.0
        %600 = vmatpush1.msra.mxu0 0.0
        %601 = vmatprep.subr.mxu0 0.0
        %602 = vmatpush1.msra.mxu0 0.0
        %603 = vmatprep.subr.mxu0 0.0
        %604 = vmatpush1.msra.mxu0 0.0
        %605 = vmatprep.subr.mxu0 0.0
        %606 = vmatpush1.msra.mxu0 0.0
        %607 = vmatprep.subr.mxu0 0.0
        %608 = vmatpush1.msra.mxu0 0.0
        %609 = vmatprep.subr.mxu0 0.0
        %610 = vmatpush1.msra.mxu0 0.0
        %611 = vmatprep.subr.mxu0 0.0
        %612 = vmatpush1.msra.mxu0 0.0
        %613 = vmatprep.subr.mxu0 0.0
        %614 = vmatpush1.msra.mxu0 0.0
        %615 = vmatprep.subr.mxu0 0.0
        %616 = vmatpush1.msra.mxu0 0.0
        %617 = vmatprep.subr.mxu0 0.0
        %618 = vmatpush1.msra.mxu0 0.0
        %619 = vmatprep.subr.mxu0 0.0
        %620 = vmatpush1.msra.mxu0 0.0
        %621 = vmatprep.subr.mxu0 0.0
        %622 = vmatpush1.msra.mxu0 0.0
        %623 = vmatprep.subr.mxu0 0.0
        %624 = vmatpush1.msra.mxu0 0.0
        %625 = vmatprep.subr.mxu0 0.0
        %626 = vmatpush1.msra.mxu0 0.0
        %627 = vmatprep.subr.mxu0 0.0
        %628 = vmatpush1.msra.mxu0 0.0
        %629 = vmatprep.subr.mxu0 0.0
        %630 = vmatpush1.msra.mxu0 0.0
        %631 = vmatprep.subr.mxu0 0.0
        %632 = vmatpush1.msra.mxu0 0.0
        %633 = vmatprep.mubr.f32.mxu0 0.0
        %634 = vmatmul.mubr.f32.gmra.mrb[0].mxu0 %v564
        %v635 = vpop.f32.mrb[0].mxu0
        %v636 = vadd.f32 %v560, %v635
        %v637 = vpop.f32.mrb[0].mxu0
        %638 = vmatprep.mubr.f32.mxu0 0.0
        %639 = vmatmul.mubr.f32.gmra.mrb[0].mxu0 %v567
        %v640 = vpop.f32.mrb[0].mxu0
        %v641 = vadd.f32 %v560, %v640
        %v642 = vpop.f32.mrb[0].mxu0
        %643 = vdwg.mxu0
        %v644 = vmax.f32 %v636, 0.0
        %v645 = vmax.f32 %v641, 0.0
        %v646 = vld [vmem:[%s5] sm:$0x1]
        %v648 = vlaneseq
        %v649 = vshrl.u32 %v648, 7
        %v650 = vsub.s32 0, %v649
        %v651 = vrot.slane %v646, %v650
        %v653 = vmul.f32 %v644, %v651
        %v654 = vmul.f32 %v645, %v651
        %vm655 = vcmask 261120
        %v656 = vsel %vm655, %v653, 0.0
        %657 = vadd.xlane.f32.xlu0 %v656
        %v658 = vpop.xlane.xlu0 %657
        %v659 = vsel %vm655, %v654, 0.0
        %660 = vadd.xlane.f32.xlu0 %v659
        %v661 = vpop.xlane.xlu0 %660
        %v662 = vld [vmem:[#allocation2] sm:$0x1]
        %v664 = vlaneseq
        %v665 = vshrl.u32 %v664, 7
        %v666 = vsub.s32 0, %v665
        %v667 = vrot.slane %v662, %v666
        %v669 = vadd.f32 %v658, %v667
        %v670 = vadd.f32 %v661, %v667
        %v671 = vxor.u32 %v669, 2147483648
        %v672 = vxor.u32 %v670, 2147483648
        %v673 = vmul.f32 %v671, 1.442695
        %v674 = vpow.pop %v673
        %v675 = vmul.f32 %v672, 1.442695
        %v676 = vpow.pop %v675
        %v677 = vadd.f32 %v674, 1.0
        %v678 = vadd.f32 %v676, 1.0
        %v679 = vrcp.pop %v677
        %v680 = vmul.f32 1.0, %v679
        %v681 = vrcp.pop %v678
        %v682 = vmul.f32 1.0, %v681
        %vm683 = vcmask 7168
        %684 = vst.msk [vmem:[%s287] sm:$0xff] %vm683, %v680
        %685 = vst.msk [vmem:[%s287 + $0x8] sm:$0xff] %vm683, %v682
        %s686 = sand.u32 %s180, 1
        %s687 = sand.u32 %s180, 1
        %s688 = smul.addr %s687, 16
        %s689 = scalar_lea.vmem [#allocation3], %s688
        // Predicated region
        $region49: #{tpu_custom_call.1} parent=47 // pred_check
          %p690 = pneg %p190
        $region50: #{tpu_custom_call.1} parent=47 // pred_check_branch
          %692 = sbr.rel (%p690) target = $region52
        $region51: #{tpu_custom_call.1} parent=47 // pred_region
          %s693 = smul.u32 2, %s20
          %s694 = ssub.s32 7, %s693
          %p695 = scmp.lt.s32.totalorder %s694, 2
          %s696 = scalar_select %p695, %s694, 2
          %s697 = smul.u32 128, %s696
          %p698 = scmp.ne.s32.totalorder 0, %s697
          %s699 = smul.addr %s693, 8
          %s700 = scalar_lea.vmem %s7, %s699
          // Predicated region
          $region53: #{tpu_custom_call.1} parent=51 // pred_check
            %p701 = pneg %p698
          $region54: #{tpu_custom_call.1} parent=51 // pred_check_branch
            %703 = sbr.rel (%p701) target = $region56
          $region55: #{tpu_custom_call.1} parent=51 // pred_region
            // Predicated region
            $region57: #{tpu_custom_call.1} parent=55 // pred_check
              _
            $region58: #{tpu_custom_call.1} parent=55 // pred_check_branch
              %705 = sbr.rel (0) target = $region60
            $region59: #{tpu_custom_call.1} parent=55 // pred_region
              // Predicated region
              $region79: #{tpu_custom_call.1} parent=59 // pred_check
                _
              $region80: #{tpu_custom_call.1} parent=59 // pred_check_branch
                %756 = sbr.rel (0) target = $region82
              $region81: #{tpu_custom_call.1} parent=59 // pred_region
                %s757 = sshrl.u32 %s696, 1
                // While loop
                $region83: #{tpu_custom_call.1} parent=81 // loop_pre_header
                  _
                $region84: #{tpu_custom_call.1} parent=81 // loop_header
                  %s759 = sphi 0, %s761
                  %p760 = scmp.ge.s32.totalorder %s759, %s757
                  %s764 = sphi 0, %s773
                  %s765 = sphi %s689, %s776
                  %s766 = sphi %s700, %s777
                $region85: #{tpu_custom_call.1} parent=81 // loop_header_branch
                  %763 = sbr.rel (%p760) target = $region89
                $region86: #{tpu_custom_call.1} parent=81 // loop_body
                  %v767 = vld [vmem:[%s765] sm:$0xff]
                  %768 = vst [vmem:[%s766] sm:$0xff] %v767
                  %v769 = vld [vmem:[%s765 + $0x8] sm:$0xff]
                  %770 = vst [vmem:[%s766 + $0x8] sm:$0xff] %v769
                  %s771 = sadd.s32 1, %s764
                  %p772 = scmp.ge.s32.totalorder %s771, %s757
                  %s773 = scalar_select %p772, 0, %s771
                  %s774 = smul.u32 %s773, 16
                  %s775 = smul.u32 %s773, 16
                  %s776 = scalar_lea.vmem %s689, %s774 [#allocation3]
                  %s777 = scalar_lea.vmem %s700, %s775
                $region87: #{tpu_custom_call.1} parent=81 // loop_footer
                  %s761 = sadd.s32 %s759, 1
                $region88: #{tpu_custom_call.1} parent=81 // loop_footer_branch
                  %758 = sbr.rel target = $region84
                $region89: #{tpu_custom_call.1} parent=81 // loop_exit
                  _
                %s778 = sshrl.u32 %s696, 1
                %s779 = sand.u32 %s696, 1
                %s780 = smul.u32 %s778, 2
                %s781 = smul.u32 8, %s780
                %s782 = scalar_lea.vmem %s689, %s781 [#allocation3]
                %s783 = smul.u32 8, %s780
                %s784 = scalar_lea.vmem %s700, %s783
                // While loop
                $region90: #{tpu_custom_call.1} parent=81 // loop_pre_header
                  _
                $region91: #{tpu_custom_call.1} parent=81 // loop_header
                  %s786 = sphi 0, %s788
                  %p787 = scmp.ge.s32.totalorder %s786, %s779
                  %s791 = sphi 0, %s798
                  %s792 = sphi %s782, %s801
                  %s793 = sphi %s784, %s802
                $region92: #{tpu_custom_call.1} parent=81 // loop_header_branch
                  %790 = sbr.rel (%p787) target = $region96
                $region93: #{tpu_custom_call.1} parent=81 // loop_body
                  %v794 = vld [vmem:[%s792] sm:$0xff]
                  %795 = vst [vmem:[%s793] sm:$0xff] %v794
                  %s796 = sadd.s32 1, %s791
                  %p797 = scmp.ge.s32.totalorder %s796, %s779
                  %s798 = scalar_select %p797, 0, %s796
                  %s799 = smul.u32 %s798, 8
                  %s800 = smul.u32 %s798, 8
                  %s801 = scalar_lea.vmem %s782, %s799 [#allocation3]
                  %s802 = scalar_lea.vmem %s784, %s800
                $region94: #{tpu_custom_call.1} parent=81 // loop_footer
                  %s788 = sadd.s32 %s786, 1
                $region95: #{tpu_custom_call.1} parent=81 // loop_footer_branch
                  %785 = sbr.rel target = $region91
                $region96: #{tpu_custom_call.1} parent=81 // loop_exit
                  _
              $region82: #{tpu_custom_call.1} parent=59 // pred_fallthru
                _
              // Predicated region
              $region97: #{tpu_custom_call.1} parent=59 // pred_check
                _
              $region98: #{tpu_custom_call.1} parent=59 // pred_check_branch
                %804 = sbr.rel target = $region100
              $region99: #{tpu_custom_call.1} parent=59 // pred_region
                _
              $region100: #{tpu_custom_call.1} parent=59 // pred_fallthru
                _
            $region60: #{tpu_custom_call.1} parent=55 // pred_fallthru
              _
            // Predicated region
            $region61: #{tpu_custom_call.1} parent=55 // pred_check
              _
            $region62: #{tpu_custom_call.1} parent=55 // pred_check_branch
              %707 = sbr.rel target = $region64
            $region63: #{tpu_custom_call.1} parent=55 // pred_region
              %s709 = sshrl.u32 %s696, 1
              // While loop
              $region65: #{tpu_custom_call.1} parent=63 // loop_pre_header
                _
              $region66: #{tpu_custom_call.1} parent=63 // loop_header
                %s711 = sphi 0, %s713
                %p712 = scmp.ge.s32.totalorder %s711, %s709
                %s716 = sphi 0, %s725
                %s717 = sphi %s689, %s728
                %s718 = sphi %s700, %s729
              $region67: #{tpu_custom_call.1} parent=63 // loop_header_branch
                %715 = sbr.rel (%p712) target = $region71
              $region68: #{tpu_custom_call.1} parent=63 // loop_body
                %v719 = vld [vmem:[%s717] sm:$0xff]
                %720 = vst [vmem:[%s718] sm:$0xff] %v719
                %v721 = vld [vmem:[%s717 + $0x8] sm:$0xff]
                %722 = vst [vmem:[%s718 + $0x8] sm:$0xff] %v721
                %s723 = sadd.s32 1, %s716
                %p724 = scmp.ge.s32.totalorder %s723, %s709
                %s725 = scalar_select %p724, 0, %s723
                %s726 = smul.u32 %s725, 16
                %s727 = smul.u32 %s725, 16
                %s728 = scalar_lea.vmem %s689, %s726 [#allocation3]
                %s729 = scalar_lea.vmem %s700, %s727
              $region69: #{tpu_custom_call.1} parent=63 // loop_footer
                %s713 = sadd.s32 %s711, 1
              $region70: #{tpu_custom_call.1} parent=63 // loop_footer_branch
                %710 = sbr.rel target = $region66
              $region71: #{tpu_custom_call.1} parent=63 // loop_exit
                _
              %s730 = sshrl.u32 %s696, 1
              %s731 = sand.u32 %s696, 1
              %s732 = smul.u32 %s730, 2
              %s733 = smul.u32 8, %s732
              %s734 = scalar_lea.vmem %s689, %s733 [#allocation3]
              %s735 = smul.u32 8, %s732
              %s736 = scalar_lea.vmem %s700, %s735
              // While loop
              $region72: #{tpu_custom_call.1} parent=63 // loop_pre_header
                _
              $region73: #{tpu_custom_call.1} parent=63 // loop_header
                %s738 = sphi 0, %s740
                %p739 = scmp.ge.s32.totalorder %s738, %s731
                %s743 = sphi 0, %s750
                %s744 = sphi %s734, %s753
                %s745 = sphi %s736, %s754
              $region74: #{tpu_custom_call.1} parent=63 // loop_header_branch
                %742 = sbr.rel (%p739) target = $region78
              $region75: #{tpu_custom_call.1} parent=63 // loop_body
                %v746 = vld [vmem:[%s744] sm:$0xff]
                %747 = vst [vmem:[%s745] sm:$0xff] %v746
                %s748 = sadd.s32 1, %s743
                %p749 = scmp.ge.s32.totalorder %s748, %s731
                %s750 = scalar_select %p749, 0, %s748
                %s751 = smul.u32 %s750, 8
                %s752 = smul.u32 %s750, 8
                %s753 = scalar_lea.vmem %s734, %s751 [#allocation3]
                %s754 = scalar_lea.vmem %s736, %s752
              $region76: #{tpu_custom_call.1} parent=63 // loop_footer
                %s740 = sadd.s32 %s738, 1
              $region77: #{tpu_custom_call.1} parent=63 // loop_footer_branch
                %737 = sbr.rel target = $region73
              $region78: #{tpu_custom_call.1} parent=63 // loop_exit
                _
            $region64: #{tpu_custom_call.1} parent=55 // pred_fallthru
              _
          $region56: #{tpu_custom_call.1} parent=51 // pred_fallthru
            _
          %805 = vnop
        $region52: #{tpu_custom_call.1} parent=47 // pred_fallthru
          _
      $region48: #{tpu_custom_call.1} parent=5 // pred_fallthru
        _
      %p806 = scmp.le.s32.totalorder 2, %s15
      // Predicated region
      $region101: #{tpu_custom_call.1} parent=5 // pred_check
        %p807 = pneg %p806
      $region102: #{tpu_custom_call.1} parent=5 // pred_check_branch
        %809 = sbr.rel (%p807) target = $region104
      $region103: #{tpu_custom_call.1} parent=5 // pred_region
        %s810 = ssub.s32 %s15, 2
        // Predicated region
        $region105: #{tpu_custom_call.1} parent=103 // pred_check
          %p811 = pneg %p196
        $region106: #{tpu_custom_call.1} parent=103 // pred_check_branch
          %813 = sbr.rel (%p811) target = $region108
        $region107: #{tpu_custom_call.1} parent=103 // pred_region
          %s814 = sand.u32 %s181, 1
          %s815 = sand.u32 %s181, 1
          %s816 = smul.addr %s815, 16
          %s817 = scalar_lea.vmem [#allocation3], %s816
        $region108: #{tpu_custom_call.1} parent=103 // pred_fallthru
          _
      $region104: #{tpu_custom_call.1} parent=5 // pred_fallthru
        _
    $region6: #{tpu_custom_call.1} parent=1 // loop_footer
      %s19 = sadd.s32 1, %s15
    $region7: #{tpu_custom_call.1} parent=1 // loop_footer_branch
      %14 = sbr.rel target = $region3
    $region8: #{tpu_custom_call.1} parent=1 // loop_exit
      _

</llo_original>
